<compile_context>
chip_gen: v6e
topology: v6e:2x2x1
jax: 0.10.0
libtpu: 0.0.40
codegen_flags: <defaults>
</compile_context>

<pallas_src>
import functools

import jax
import jax.numpy as jnp
from jax.experimental import pallas as pl
from jax.experimental.pallas import tpu as pltpu


def _conv1x1_kernel(xp_ref, w_ref, b_ref, o_ref, res_ref, *, reps):
    """1x1-conv (channel mix) over a zero-padded image block.

    xp_ref : (chunk, Cin, Hp, Wp)  VMEM  zero-padded input images
    w_ref  : (Cout, Cin)           SMEM  1x1 conv weights (scalar broadcasts)
    b_ref  : (Cout,)               SMEM  conv bias
    o_ref  : (chunk, Cout, Hp, Wp) VMEM  conv output (spatially padded)
    res_ref: (chunk, Cout, Hp, Wp) VMEM  scratch reused across query replicas
    """
    qi = pl.program_id(1)              # query-replica index (innermost axis)
    cin = xp_ref.shape[1]
    cout = o_ref.shape[1]

    @pl.when(qi == 0)
    def _compute():
        # co-outer, one fused expression per output channel: a single live
        # accumulator, then ONE aligned full-plane store (border pixels see
        # only the zero padding, so they come out as bias automatically).
        for co in range(cout):
            acc = b_ref[co] + w_ref[co, 0] * xp_ref[:, 0]
            for ci in range(1, cin):
                acc = acc + w_ref[co, ci] * xp_ref[:, ci]
            plane = acc.astype(o_ref.dtype)
            o_ref[:, co] = plane
            if reps > 1:
                res_ref[:, co] = plane

    if reps > 1:
        # Replicas only differ in where the output lands: qi > 0 steps are a
        # pure scratch -> output store (no recompute, no input re-DMA).
        @pl.when(qi != 0)
        def _replicate():
            o_ref[...] = res_ref[...]


def _num_batch_chunks(bsz):
    """Split the batch in two only on chips with 2 TensorCores (megacore)."""
    if bsz < 2 or bsz % 2 != 0:
        return 1
    try:
        kind = jax.devices()[0].device_kind.lower()
    except Exception:
        return 1
    # Single-TensorCore chips: splitting only adds a grid step + smaller DMAs.
    if any(s in kind for s in
           ("v5e", "v5 lite", "v5lite", "v6e", "v6 lite", "trillium")):
        return 1
    # Megacore chips (2 TensorCores per device): v4, v5p, v7x.
    if any(s in kind for s in ("v4", "v5p", "v5", "v7")):
        return 2
    return 1


def model_forward(x, w, b, num_queries=1, n_heads=2):
    """Mirrors Model.forward as far as it is well-defined in PyTorch."""
    bsz, cin, h, wdt = x.shape
    if bsz < num_queries:
        raise ValueError(
            "The number of input images should be more than or equal to the "
            "number of queries.")
    cout = w.shape[0]
    hp, wp = h + 2, wdt + 2
    reps = num_queries if n_heads > 0 else 1  # torch skips repeat if n_heads<=0

    if cout == 0:  # degenerate n_heads <= 0 case: zero-channel conv output
        return jnp.zeros((reps * bsz, 0, hp, wp), jnp.float32)

    # Zero-pad the input once (tiny XLA pass).  A 1x1 conv of the padded input
    # is exactly the padding=1 Conv2d, so the kernel writes each output element
    # once with an aligned full-block store.
    xpad = jnp.pad(x.astype(jnp.float32), ((0, 0), (0, 0), (1, 1), (1, 1)))

    nchunks = _num_batch_chunks(bsz)
    chunk = bsz // nchunks

    kernel = functools.partial(_conv1x1_kernel, reps=reps)

    out = pl.pallas_call(
        kernel,
        out_shape=jax.ShapeDtypeStruct((reps * bsz, cout, hp, wp), jnp.float32),
        grid_spec=pltpu.PrefetchScalarGridSpec(
            num_scalar_prefetch=0,
            grid=(nchunks, reps),
            in_specs=[
                pl.BlockSpec((chunk, cin, hp, wp),
                             lambda bi, qi: (bi, 0, 0, 0)),
                pl.BlockSpec(memory_space=pltpu.MemorySpace.SMEM),
                pl.BlockSpec(memory_space=pltpu.MemorySpace.SMEM),
            ],
            # torch repeat(1, Q, 1, 1, 1).reshape(-1, ...) => out[q*B + n] = v[n]
            out_specs=pl.BlockSpec((chunk, cout, hp, wp),
                                   lambda bi, qi: (qi * nchunks + bi, 0, 0, 0)),
            scratch_shapes=[pltpu.VMEM((chunk, cout, hp, wp), jnp.float32)],
        ),
        compiler_params=pltpu.CompilerParams(
            dimension_semantics=("parallel", "arbitrary")),
    )(xpad, w.astype(jnp.float32), b.astype(jnp.float32))

    # TODO(synk): the remainder of the reference forward is ill-formed in
    # PyTorch (permute(1,0,2) on a 4-D tensor raises; TransformerEncoderLayer
    # is built with a nonexistent `num_heads` kwarg and d_model=1 not divisible
    # by n_heads=2; TransformerEncoder receives a python list and `queries` in
    # its mask slot), so the transformer stage has no exact semantics to
    # reproduce.  We return the last well-defined intermediate
    # (conv + fused repeat/reshape).
    return out


if __name__ == "__main__":
    num_queries, n_heads = 1, 2
    # Small shapes consistent with the module (reference uses (16, 3, 64, 64)).
    B, Cin, H, W = 4, 3, 16, 16
    Cout = max(n_heads * 2, 0)

    key = jax.random.PRNGKey(0)
    kx, kw, kb = jax.random.split(key, 3)
    x = jax.random.normal(kx, (B, Cin, H, W), jnp.float32)
    # Deterministic Conv2d-style init (kaiming-uniform bound = 1/sqrt(fan_in)).
    bound = 1.0 / (Cin ** 0.5)
    w = jax.random.uniform(kw, (Cout, Cin), jnp.float32, -bound, bound)
    b = jax.random.uniform(kb, (Cout,), jnp.float32, -bound, bound)

    out = jax.block_until_ready(model_forward(x, w, b, num_queries, n_heads))

    # Plain-JAX reference for the well-defined portion (1x1 conv, padding=1,
    # then repeat/reshape).
    xp = jnp.pad(x, ((0, 0), (0, 0), (1, 1), (1, 1)))
    conv = jnp.einsum("oc,bchw->bohw", w, xp) + b[None, :, None, None]
    ref = jnp.tile(conv[None], (1, num_queries, 1, 1, 1)).reshape(
        -1, Cout, H + 2, W + 2)

    assert out.shape == (B * num_queries, Cout, H + 2, W + 2), out.shape
    assert jnp.allclose(out, ref, atol=1e-5, rtol=1e-5)

    # Also exercise the fused query-replication path (num_queries > 1).
    q2 = 2
    out2 = jax.block_until_ready(model_forward(x, w, b, q2, n_heads))
    ref2 = jnp.tile(conv[None], (1, q2, 1, 1, 1)).reshape(
        -1, Cout, H + 2, W + 2)
    assert out2.shape == (B * q2, Cout, H + 2, W + 2), out2.shape
    assert jnp.allclose(out2, ref2, atol=1e-5, rtol=1e-5)

    print("KERNEL_OK")
</pallas_src>

<mosaic_0001>
module attributes {stable_mosaic.version = 11 : i64} {
  func.func @_conv1x1_kernel(%arg0: i32, %arg1: i32, %arg2: memref<4x3x18x18xf32, #tpu.memory_space<vmem>>, %arg3: memref<4x3xf32, #tpu.memory_space<smem>>, %arg4: memref<4xf32, #tpu.memory_space<smem>>, %arg5: memref<4x4x18x18xf32, #tpu.memory_space<vmem>>, %arg6: memref<4x4x18x18xf32, #tpu.memory_space<vmem>>) attributes {dimension_semantics = [#tpu.dimension_semantics<parallel>, #tpu.dimension_semantics<arbitrary>], iteration_bounds = array<i64: 1, 1>, scalar_prefetch = 0 : i64, scratch_operands = 1 : i64, tpu.core_type = #tpu.core_type<tc>, window_params = [{transform_indices = @transform_0, window_bounds = array<i64: 4, 3, 18, 18>}, {transform_indices = @transform_1, window_bounds = array<i64: 4, 3>}, {transform_indices = @transform_2, window_bounds = array<i64: 4>}, {transform_indices = @transform_3, window_bounds = array<i64: 4, 4, 18, 18>}]} {
    %c0_i32 = arith.constant 0 : i32
    %0 = arith.cmpi eq, %arg1, %c0_i32 : i32
    %1 = arith.extui %0 : i1 to i32
    %c0_i32_0 = arith.constant 0 : i32
    %2 = arith.cmpi ne, %1, %c0_i32_0 : i32
    scf.if %2 {
      %c0 = arith.constant 0 : index
      %3 = memref.load %arg4[%c0] : memref<4xf32, #tpu.memory_space<smem>>
      %c0_1 = arith.constant 0 : index
      %c0_2 = arith.constant 0 : index
      %4 = memref.load %arg3[%c0_1, %c0_2] : memref<4x3xf32, #tpu.memory_space<smem>>
      %c0_3 = arith.constant 0 : index
      %c0_4 = arith.constant 0 : index
      %c0_5 = arith.constant 0 : index
      %c0_6 = arith.constant 0 : index
      %5 = vector.load %arg2[%c0_3, %c0_4, %c0_5, %c0_6] : memref<4x3x18x18xf32, #tpu.memory_space<vmem>>, vector<4x1x18x18xf32>
      %6 = vector.shape_cast %5 : vector<4x1x18x18xf32> to vector<4x18x18xf32>
      %7 = vector.broadcast %4 : f32 to vector<4x18x18xf32>
      %8 = arith.mulf %7, %6 : vector<4x18x18xf32>
      %9 = vector.broadcast %3 : f32 to vector<4x18x18xf32>
      %10 = arith.addf %9, %8 : vector<4x18x18xf32>
      %c0_7 = arith.constant 0 : index
      %c1 = arith.constant 1 : index
      %11 = memref.load %arg3[%c0_7, %c1] : memref<4x3xf32, #tpu.memory_space<smem>>
      %c0_8 = arith.constant 0 : index
      %c1_9 = arith.constant 1 : index
      %c0_10 = arith.constant 0 : index
      %c0_11 = arith.constant 0 : index
      %12 = vector.load %arg2[%c0_8, %c1_9, %c0_10, %c0_11] : memref<4x3x18x18xf32, #tpu.memory_space<vmem>>, vector<4x1x18x18xf32>
      %13 = vector.shape_cast %12 : vector<4x1x18x18xf32> to vector<4x18x18xf32>
      %14 = vector.broadcast %11 : f32 to vector<4x18x18xf32>
      %15 = arith.mulf %14, %13 : vector<4x18x18xf32>
      %16 = arith.addf %10, %15 : vector<4x18x18xf32>
      %c0_12 = arith.constant 0 : index
      %c2 = arith.constant 2 : index
      %17 = memref.load %arg3[%c0_12, %c2] : memref<4x3xf32, #tpu.memory_space<smem>>
      %c0_13 = arith.constant 0 : index
      %c2_14 = arith.constant 2 : index
      %c0_15 = arith.constant 0 : index
      %c0_16 = arith.constant 0 : index
      %18 = vector.load %arg2[%c0_13, %c2_14, %c0_15, %c0_16] : memref<4x3x18x18xf32, #tpu.memory_space<vmem>>, vector<4x1x18x18xf32>
      %19 = vector.shape_cast %18 : vector<4x1x18x18xf32> to vector<4x18x18xf32>
      %20 = vector.broadcast %17 : f32 to vector<4x18x18xf32>
      %21 = arith.mulf %20, %19 : vector<4x18x18xf32>
      %22 = arith.addf %16, %21 : vector<4x18x18xf32>
      %c0_17 = arith.constant 0 : index
      %c0_18 = arith.constant 0 : index
      %c0_19 = arith.constant 0 : index
      %c0_20 = arith.constant 0 : index
      %23 = vector.load %arg5[%c0_17, %c0_18, %c0_19, %c0_20] : memref<4x4x18x18xf32, #tpu.memory_space<vmem>>, vector<4x1x18x18xf32>
      %24 = vector.shape_cast %23 : vector<4x1x18x18xf32> to vector<4x18x18xf32>
      %25 = vector.shape_cast %22 : vector<4x18x18xf32> to vector<4x1x18x18xf32>
      tpu.vector_store %arg5[%c0_17, %c0_18, %c0_19, %c0_20], %25 {strides = array<i32>} : memref<4x4x18x18xf32, #tpu.memory_space<vmem>>, vector<4x1x18x18xf32>,
      %c1_21 = arith.constant 1 : index
      %26 = memref.load %arg4[%c1_21] : memref<4xf32, #tpu.memory_space<smem>>
      %c1_22 = arith.constant 1 : index
      %c0_23 = arith.constant 0 : index
      %27 = memref.load %arg3[%c1_22, %c0_23] : memref<4x3xf32, #tpu.memory_space<smem>>
      %c0_24 = arith.constant 0 : index
      %c0_25 = arith.constant 0 : index
      %c0_26 = arith.constant 0 : index
      %c0_27 = arith.constant 0 : index
      %28 = vector.load %arg2[%c0_24, %c0_25, %c0_26, %c0_27] : memref<4x3x18x18xf32, #tpu.memory_space<vmem>>, vector<4x1x18x18xf32>
      %29 = vector.shape_cast %28 : vector<4x1x18x18xf32> to vector<4x18x18xf32>
      %30 = vector.broadcast %27 : f32 to vector<4x18x18xf32>
      %31 = arith.mulf %30, %29 : vector<4x18x18xf32>
      %32 = vector.broadcast %26 : f32 to vector<4x18x18xf32>
      %33 = arith.addf %32, %31 : vector<4x18x18xf32>
      %c1_28 = arith.constant 1 : index
      %c1_29 = arith.constant 1 : index
      %34 = memref.load %arg3[%c1_28, %c1_29] : memref<4x3xf32, #tpu.memory_space<smem>>
      %c0_30 = arith.constant 0 : index
      %c1_31 = arith.constant 1 : index
      %c0_32 = arith.constant 0 : index
      %c0_33 = arith.constant 0 : index
      %35 = vector.load %arg2[%c0_30, %c1_31, %c0_32, %c0_33] : memref<4x3x18x18xf32, #tpu.memory_space<vmem>>, vector<4x1x18x18xf32>
      %36 = vector.shape_cast %35 : vector<4x1x18x18xf32> to vector<4x18x18xf32>
      %37 = vector.broadcast %34 : f32 to vector<4x18x18xf32>
      %38 = arith.mulf %37, %36 : vector<4x18x18xf32>
      %39 = arith.addf %33, %38 : vector<4x18x18xf32>
      %c1_34 = arith.constant 1 : index
      %c2_35 = arith.constant 2 : index
      %40 = memref.load %arg3[%c1_34, %c2_35] : memref<4x3xf32, #tpu.memory_space<smem>>
      %c0_36 = arith.constant 0 : index
      %c2_37 = arith.constant 2 : index
      %c0_38 = arith.constant 0 : index
      %c0_39 = arith.constant 0 : index
      %41 = vector.load %arg2[%c0_36, %c2_37, %c0_38, %c0_39] : memref<4x3x18x18xf32, #tpu.memory_space<vmem>>, vector<4x1x18x18xf32>
      %42 = vector.shape_cast %41 : vector<4x1x18x18xf32> to vector<4x18x18xf32>
      %43 = vector.broadcast %40 : f32 to vector<4x18x18xf32>
      %44 = arith.mulf %43, %42 : vector<4x18x18xf32>
      %45 = arith.addf %39, %44 : vector<4x18x18xf32>
      %c0_40 = arith.constant 0 : index
      %c1_41 = arith.constant 1 : index
      %c0_42 = arith.constant 0 : index
      %c0_43 = arith.constant 0 : index
      %46 = vector.load %arg5[%c0_40, %c1_41, %c0_42, %c0_43] : memref<4x4x18x18xf32, #tpu.memory_space<vmem>>, vector<4x1x18x18xf32>
      %47 = vector.shape_cast %46 : vector<4x1x18x18xf32> to vector<4x18x18xf32>
      %48 = vector.shape_cast %45 : vector<4x18x18xf32> to vector<4x1x18x18xf32>
      tpu.vector_store %arg5[%c0_40, %c1_41, %c0_42, %c0_43], %48 {strides = array<i32>} : memref<4x4x18x18xf32, #tpu.memory_space<vmem>>, vector<4x1x18x18xf32>,
      %c2_44 = arith.constant 2 : index
      %49 = memref.load %arg4[%c2_44] : memref<4xf32, #tpu.memory_space<smem>>
      %c2_45 = arith.constant 2 : index
      %c0_46 = arith.constant 0 : index
      %50 = memref.load %arg3[%c2_45, %c0_46] : memref<4x3xf32, #tpu.memory_space<smem>>
      %c0_47 = arith.constant 0 : index
      %c0_48 = arith.constant 0 : index
      %c0_49 = arith.constant 0 : index
      %c0_50 = arith.constant 0 : index
      %51 = vector.load %arg2[%c0_47, %c0_48, %c0_49, %c0_50] : memref<4x3x18x18xf32, #tpu.memory_space<vmem>>, vector<4x1x18x18xf32>
      %52 = vector.shape_cast %51 : vector<4x1x18x18xf32> to vector<4x18x18xf32>
      %53 = vector.broadcast %50 : f32 to vector<4x18x18xf32>
      %54 = arith.mulf %53, %52 : vector<4x18x18xf32>
      %55 = vector.broadcast %49 : f32 to vector<4x18x18xf32>
      %56 = arith.addf %55, %54 : vector<4x18x18xf32>
      %c2_51 = arith.constant 2 : index
      %c1_52 = arith.constant 1 : index
      %57 = memref.load %arg3[%c2_51, %c1_52] : memref<4x3xf32, #tpu.memory_space<smem>>
      %c0_53 = arith.constant 0 : index
      %c1_54 = arith.constant 1 : index
      %c0_55 = arith.constant 0 : index
      %c0_56 = arith.constant 0 : index
      %58 = vector.load %arg2[%c0_53, %c1_54, %c0_55, %c0_56] : memref<4x3x18x18xf32, #tpu.memory_space<vmem>>, vector<4x1x18x18xf32>
      %59 = vector.shape_cast %58 : vector<4x1x18x18xf32> to vector<4x18x18xf32>
      %60 = vector.broadcast %57 : f32 to vector<4x18x18xf32>
      %61 = arith.mulf %60, %59 : vector<4x18x18xf32>
      %62 = arith.addf %56, %61 : vector<4x18x18xf32>
      %c2_57 = arith.constant 2 : index
      %c2_58 = arith.constant 2 : index
      %63 = memref.load %arg3[%c2_57, %c2_58] : memref<4x3xf32, #tpu.memory_space<smem>>
      %c0_59 = arith.constant 0 : index
      %c2_60 = arith.constant 2 : index
      %c0_61 = arith.constant 0 : index
      %c0_62 = arith.constant 0 : index
      %64 = vector.load %arg2[%c0_59, %c2_60, %c0_61, %c0_62] : memref<4x3x18x18xf32, #tpu.memory_space<vmem>>, vector<4x1x18x18xf32>
      %65 = vector.shape_cast %64 : vector<4x1x18x18xf32> to vector<4x18x18xf32>
      %66 = vector.broadcast %63 : f32 to vector<4x18x18xf32>
      %67 = arith.mulf %66, %65 : vector<4x18x18xf32>
      %68 = arith.addf %62, %67 : vector<4x18x18xf32>
      %c0_63 = arith.constant 0 : index
      %c2_64 = arith.constant 2 : index
      %c0_65 = arith.constant 0 : index
      %c0_66 = arith.constant 0 : index
      %69 = vector.load %arg5[%c0_63, %c2_64, %c0_65, %c0_66] : memref<4x4x18x18xf32, #tpu.memory_space<vmem>>, vector<4x1x18x18xf32>
      %70 = vector.shape_cast %69 : vector<4x1x18x18xf32> to vector<4x18x18xf32>
      %71 = vector.shape_cast %68 : vector<4x18x18xf32> to vector<4x1x18x18xf32>
      tpu.vector_store %arg5[%c0_63, %c2_64, %c0_65, %c0_66], %71 {strides = array<i32>} : memref<4x4x18x18xf32, #tpu.memory_space<vmem>>, vector<4x1x18x18xf32>,
      %c3 = arith.constant 3 : index
      %72 = memref.load %arg4[%c3] : memref<4xf32, #tpu.memory_space<smem>>
      %c3_67 = arith.constant 3 : index
      %c0_68 = arith.constant 0 : index
      %73 = memref.load %arg3[%c3_67, %c0_68] : memref<4x3xf32, #tpu.memory_space<smem>>
      %c0_69 = arith.constant 0 : index
      %c0_70 = arith.constant 0 : index
      %c0_71 = arith.constant 0 : index
      %c0_72 = arith.constant 0 : index
      %74 = vector.load %arg2[%c0_69, %c0_70, %c0_71, %c0_72] : memref<4x3x18x18xf32, #tpu.memory_space<vmem>>, vector<4x1x18x18xf32>
      %75 = vector.shape_cast %74 : vector<4x1x18x18xf32> to vector<4x18x18xf32>
      %76 = vector.broadcast %73 : f32 to vector<4x18x18xf32>
      %77 = arith.mulf %76, %75 : vector<4x18x18xf32>
      %78 = vector.broadcast %72 : f32 to vector<4x18x18xf32>
      %79 = arith.addf %78, %77 : vector<4x18x18xf32>
      %c3_73 = arith.constant 3 : index
      %c1_74 = arith.constant 1 : index
      %80 = memref.load %arg3[%c3_73, %c1_74] : memref<4x3xf32, #tpu.memory_space<smem>>
      %c0_75 = arith.constant 0 : index
      %c1_76 = arith.constant 1 : index
      %c0_77 = arith.constant 0 : index
      %c0_78 = arith.constant 0 : index
      %81 = vector.load %arg2[%c0_75, %c1_76, %c0_77, %c0_78] : memref<4x3x18x18xf32, #tpu.memory_space<vmem>>, vector<4x1x18x18xf32>
      %82 = vector.shape_cast %81 : vector<4x1x18x18xf32> to vector<4x18x18xf32>
      %83 = vector.broadcast %80 : f32 to vector<4x18x18xf32>
      %84 = arith.mulf %83, %82 : vector<4x18x18xf32>
      %85 = arith.addf %79, %84 : vector<4x18x18xf32>
      %c3_79 = arith.constant 3 : index
      %c2_80 = arith.constant 2 : index
      %86 = memref.load %arg3[%c3_79, %c2_80] : memref<4x3xf32, #tpu.memory_space<smem>>
      %c0_81 = arith.constant 0 : index
      %c2_82 = arith.constant 2 : index
      %c0_83 = arith.constant 0 : index
      %c0_84 = arith.constant 0 : index
      %87 = vector.load %arg2[%c0_81, %c2_82, %c0_83, %c0_84] : memref<4x3x18x18xf32, #tpu.memory_space<vmem>>, vector<4x1x18x18xf32>
      %88 = vector.shape_cast %87 : vector<4x1x18x18xf32> to vector<4x18x18xf32>
      %89 = vector.broadcast %86 : f32 to vector<4x18x18xf32>
      %90 = arith.mulf %89, %88 : vector<4x18x18xf32>
      %91 = arith.addf %85, %90 : vector<4x18x18xf32>
      %c0_85 = arith.constant 0 : index
      %c3_86 = arith.constant 3 : index
      %c0_87 = arith.constant 0 : index
      %c0_88 = arith.constant 0 : index
      %92 = vector.load %arg5[%c0_85, %c3_86, %c0_87, %c0_88] : memref<4x4x18x18xf32, #tpu.memory_space<vmem>>, vector<4x1x18x18xf32>
      %93 = vector.shape_cast %92 : vector<4x1x18x18xf32> to vector<4x18x18xf32>
      %94 = vector.shape_cast %91 : vector<4x18x18xf32> to vector<4x1x18x18xf32>
      tpu.vector_store %arg5[%c0_85, %c3_86, %c0_87, %c0_88], %94 {strides = array<i32>} : memref<4x4x18x18xf32, #tpu.memory_space<vmem>>, vector<4x1x18x18xf32>,
    } else {
    }
    return
  }
  func.func @transform_0(%arg0: i32, %arg1: i32) -> (i32, i32, i32, i32) {
    %c0_i32 = arith.constant 0 : i32
    %c0_i32_0 = arith.constant 0 : i32
    %c0_i32_1 = arith.constant 0 : i32
    %c0_i32_2 = arith.constant 0 : i32
    return %arg0, %c0_i32, %c0_i32_0, %c0_i32_1 : i32, i32, i32, i32
  }
  func.func @transform_1(%arg0: i32, %arg1: i32) -> (i32, i32) {
    %c0_i32 = arith.constant 0 : i32
    %c0_i32_0 = arith.constant 0 : i32
    %c0_i32_1 = arith.constant 0 : i32
    return %c0_i32, %c0_i32_0 : i32, i32
  }
  func.func @transform_2(%arg0: i32, %arg1: i32) -> i32 {
    %c0_i32 = arith.constant 0 : i32
    %c0_i32_0 = arith.constant 0 : i32
    return %c0_i32 : i32
  }
  func.func @transform_3(%arg0: i32, %arg1: i32) -> (i32, i32, i32, i32) {
    %c1_i32 = arith.constant 1 : i32
    %0 = arith.muli %arg1, %c1_i32 : i32
    %1 = arith.addi %0, %arg0 : i32
    %c0_i32 = arith.constant 0 : i32
    %c0_i32_0 = arith.constant 0 : i32
    %c0_i32_1 = arith.constant 0 : i32
    %c0_i32_2 = arith.constant 0 : i32
    return %1, %c0_i32, %c0_i32_0, %c0_i32_1 : i32, i32, i32, i32
  }
}

</mosaic_0001>

<llo_original>
// kernel: tpu_custom_call.1
$region0: #{tpu_custom_call.1}
  #allocation0 [shape = 'u32[]', space=smem, size = 0x4, offset = 0x4, fixed_abs, tag = 'smem constant byte address 0x4 - core index']
  #allocation1 [shape = 'u32[144,128]{1,0:T(1,128)}', space=vmem, size = 0x12000, scoped, tag = 'internal scratch']
  #allocation2 [shape = 'f32[4,4,18,18]{3,2,1,0:T(8,128)}', space=vmem, size = 0x30000, scoped, tag = 'scratch operand']
  %s0 = inlined_call_operand.vmem [shape: f32[4,3,18,18], index: 0, kind: input, shape index: {}]
  %s1 = inlined_call_operand.vmem [shape: f32[4,3], index: 1, kind: input, shape index: {}]
  %s2 = inlined_call_operand.vmem [shape: f32[4], index: 2, kind: input, shape index: {}]
  %s3 = inlined_call_operand.vmem [shape: f32[4,4,18,18], index: 3, kind: output, shape index: {}]
  %s4 = sld [smem:[#allocation0]]
  $region34: #{tpu_custom_call.1} parent=0
    _
  %s6 = ssub.s32 1, %s4
  %s7 = scalar_select 0, %s6, %s4
  $region1: #{tpu_custom_call.1} parent=0
    #allocation3 [shape = 'u8[2048]{0}', space=smem, size = 0x800, scoped, tag = 'input window, operand 1, single buffered']
    #allocation4 [shape = 's32[1]{0}', space=sflag, size = 0x4, scoped, tag = 'scoped memory for tpu_custom_call.1']
    #allocation5 [shape = 'u8[512]{0}', space=smem, size = 0x200, scoped, tag = 'input window, operand 2, single buffered']
    #allocation6 [shape = 's32[1]{0}', space=sflag, size = 0x4, scoped, tag = 'scoped memory for tpu_custom_call.1']
    %8 = vsyncpa [#allocation4], 0
    %9 = vsyncpa [#allocation6], 0
    // Predicated region
    $region2: #{tpu_custom_call.1} parent=1 // pred_check
      _
    $region3: #{tpu_custom_call.1} parent=1 // pred_check_branch
      %11 = sbr.rel (0) target = $region5
    $region4: #{tpu_custom_call.1} parent=1 // pred_region
      _
    $region5: #{tpu_custom_call.1} parent=1 // pred_fallthru
      _
    // Predicated region
    $region6: #{tpu_custom_call.1} parent=1 // pred_check
      _
    $region7: #{tpu_custom_call.1} parent=1 // pred_check_branch
      %13 = sbr.rel (0) target = $region9
    $region8: #{tpu_custom_call.1} parent=1 // pred_region
      %s15 = ssub.s32 64, 64
      %16 = vsyncadd [#allocation4], %s15
      %s18 = sshll.u32 %s1, 4
      %s19 = int_to_ptr.vmem [resolvable:$true] %s18
      %21 = dma.vmem_to_smem %s19, 64, [#allocation3], [#allocation4]
    $region9: #{tpu_custom_call.1} parent=1 // pred_fallthru
      _
    // Predicated region
    $region10: #{tpu_custom_call.1} parent=1 // pred_check
      _
    $region11: #{tpu_custom_call.1} parent=1 // pred_check_branch
      %23 = sbr.rel (0) target = $region13
    $region12: #{tpu_custom_call.1} parent=1 // pred_region
      %s25 = ssub.s32 16, 16
      %26 = vsyncadd [#allocation6], %s25
      %s28 = sshll.u32 %s2, 4
      %s29 = int_to_ptr.vmem [resolvable:$true] %s28
      %31 = dma.vmem_to_smem %s29, 16, [#allocation5], [#allocation6]
    $region13: #{tpu_custom_call.1} parent=1 // pred_fallthru
      _
    // Predicated region
    $region14: #{tpu_custom_call.1} parent=1 // pred_check
      _
    $region15: #{tpu_custom_call.1} parent=1 // pred_check_branch
      %33 = sbr.rel (0) target = $region17
    $region16: #{tpu_custom_call.1} parent=1 // pred_region
      %34 = dma.done [#allocation4], 64
    $region17: #{tpu_custom_call.1} parent=1 // pred_fallthru
      _
    // Predicated region
    $region18: #{tpu_custom_call.1} parent=1 // pred_check
      _
    $region19: #{tpu_custom_call.1} parent=1 // pred_check_branch
      %36 = sbr.rel (0) target = $region21
    $region20: #{tpu_custom_call.1} parent=1 // pred_region
      %37 = dma.done [#allocation6], 16
    $region21: #{tpu_custom_call.1} parent=1 // pred_fallthru
      _
    %38 = sfence
    %s39 = sadd.s32 0, 0
    %s40 = smul.u32 4, %s39
    %p41 = scmp.lt.s32.totalorder %s40, 3
    %s42 = scalar_select %p41, %s40, 3
    %s43 = smul.addr %s42, 12
    %s44 = smul.addr %s43, 8
    %s45 = scalar_lea.vmem %s3, %s44
    %s46 = sadd.s32 0, 0
    %s47 = smul.u32 4, %s46
    %p48 = scmp.lt.s32.totalorder %s47, 3
    %s49 = scalar_select %p48, %s47, 3
    %s50 = smul.addr %s49, 12
    %s51 = smul.addr %s50, 8
    %s52 = scalar_lea.vmem %s3, %s51
    %s53 = sadd.s32 0, 0
    %s54 = smul.u32 4, %s53
    %p55 = scmp.eq.s32.totalorder 0, 0
    // Predicated region
    $region22: #{tpu_custom_call.1} parent=1 // pred_check
      %p56 = pneg %p55
    $region23: #{tpu_custom_call.1} parent=1 // pred_check_branch
      %58 = sbr.rel (%p56) target = $region25
    $region24: #{tpu_custom_call.1} parent=1 // pred_region
      %s59 = sld [smem:[#allocation5]]
      %s60 = sld [smem:[#allocation3]]
      %v61 = vld [vmem:[%s0] sm:$0xff]
      %v62 = vld [vmem:[%s0 + $0x8] sm:$0xff]
      %v63 = vld [vmem:[%s0 + $0x10] sm:$0x3]
      %v64 = vld [vmem:[%s0 + $0x48] sm:$0xff]
      %v65 = vld [vmem:[%s0 + $0x50] sm:$0xff]
      %v66 = vld [vmem:[%s0 + $0x58] sm:$0x3]
      %v67 = vld [vmem:[%s0 + $0x90] sm:$0xff]
      %v68 = vld [vmem:[%s0 + $0x98] sm:$0xff]
      %v69 = vld [vmem:[%s0 + $0xa0] sm:$0x3]
      %v70 = vld [vmem:[%s0 + $0xd8] sm:$0xff]
      %v71 = vld [vmem:[%s0 + $0xe0] sm:$0xff]
      %v72 = vld [vmem:[%s0 + $0xe8] sm:$0x3]
      %v73 = vstv %s60
      %v74 = vmul.f32 %v73, %v61
      %v75 = vmul.f32 %v73, %v62
      %v76 = vmul.f32 %v73, %v63
      %v77 = vmul.f32 %v73, %v64
      %v78 = vmul.f32 %v73, %v65
      %v79 = vmul.f32 %v73, %v66
      %v80 = vmul.f32 %v73, %v67
      %v81 = vmul.f32 %v73, %v68
      %v82 = vmul.f32 %v73, %v69
      %v83 = vmul.f32 %v73, %v70
      %v84 = vmul.f32 %v73, %v71
      %v85 = vmul.f32 %v73, %v72
      %v86 = vstv %s59
      %v87 = vadd.f32 %v86, %v74
      %v88 = vadd.f32 %v86, %v75
      %v89 = vadd.f32 %v86, %v76
      %v90 = vadd.f32 %v86, %v77
      %v91 = vadd.f32 %v86, %v78
      %v92 = vadd.f32 %v86, %v79
      %v93 = vadd.f32 %v86, %v80
      %v94 = vadd.f32 %v86, %v81
      %v95 = vadd.f32 %v86, %v82
      %v96 = vadd.f32 %v86, %v83
      %v97 = vadd.f32 %v86, %v84
      %v98 = vadd.f32 %v86, %v85
      %s99 = sld [smem:[#allocation3 + $0x1]]
      %s100 = scalar_lea.vmem %s0, 24
      %v101 = vld [vmem:[%s100] sm:$0xff]
      %v102 = vld [vmem:[%s100 + $0x8] sm:$0xff]
      %v103 = vld [vmem:[%s100 + $0x10] sm:$0x3]
      %v104 = vld [vmem:[%s100 + $0x48] sm:$0xff]
      %v105 = vld [vmem:[%s100 + $0x50] sm:$0xff]
      %v106 = vld [vmem:[%s100 + $0x58] sm:$0x3]
      %v107 = vld [vmem:[%s100 + $0x90] sm:$0xff]
      %v108 = vld [vmem:[%s100 + $0x98] sm:$0xff]
      %v109 = vld [vmem:[%s100 + $0xa0] sm:$0x3]
      %v110 = vld [vmem:[%s100 + $0xd8] sm:$0xff]
      %v111 = vld [vmem:[%s100 + $0xe0] sm:$0xff]
      %v112 = vld [vmem:[%s100 + $0xe8] sm:$0x3]
      %v113 = vstv %s99
      %v114 = vmul.f32 %v113, %v101
      %v115 = vmul.f32 %v113, %v102
      %v116 = vmul.f32 %v113, %v103
      %v117 = vmul.f32 %v113, %v104
      %v118 = vmul.f32 %v113, %v105
      %v119 = vmul.f32 %v113, %v106
      %v120 = vmul.f32 %v113, %v107
      %v121 = vmul.f32 %v113, %v108
      %v122 = vmul.f32 %v113, %v109
      %v123 = vmul.f32 %v113, %v110
      %v124 = vmul.f32 %v113, %v111
      %v125 = vmul.f32 %v113, %v112
      %v126 = vadd.f32 %v87, %v114
      %v127 = vadd.f32 %v88, %v115
      %v128 = vadd.f32 %v89, %v116
      %v129 = vadd.f32 %v90, %v117
      %v130 = vadd.f32 %v91, %v118
      %v131 = vadd.f32 %v92, %v119
      %v132 = vadd.f32 %v93, %v120
      %v133 = vadd.f32 %v94, %v121
      %v134 = vadd.f32 %v95, %v122
      %v135 = vadd.f32 %v96, %v123
      %v136 = vadd.f32 %v97, %v124
      %v137 = vadd.f32 %v98, %v125
      %s138 = sld [smem:[#allocation3 + $0x2]]
      %s139 = scalar_lea.vmem %s0, 48
      %v140 = vld [vmem:[%s139] sm:$0xff]
      %v141 = vld [vmem:[%s139 + $0x8] sm:$0xff]
      %v142 = vld [vmem:[%s139 + $0x10] sm:$0x3]
      %v143 = vld [vmem:[%s139 + $0x48] sm:$0xff]
      %v144 = vld [vmem:[%s139 + $0x50] sm:$0xff]
      %v145 = vld [vmem:[%s139 + $0x58] sm:$0x3]
      %v146 = vld [vmem:[%s139 + $0x90] sm:$0xff]
      %v147 = vld [vmem:[%s139 + $0x98] sm:$0xff]
      %v148 = vld [vmem:[%s139 + $0xa0] sm:$0x3]
      %v149 = vld [vmem:[%s139 + $0xd8] sm:$0xff]
      %v150 = vld [vmem:[%s139 + $0xe0] sm:$0xff]
      %v151 = vld [vmem:[%s139 + $0xe8] sm:$0x3]
      %v152 = vstv %s138
      %v153 = vmul.f32 %v152, %v140
      %v154 = vmul.f32 %v152, %v141
      %v155 = vmul.f32 %v152, %v142
      %v156 = vmul.f32 %v152, %v143
      %v157 = vmul.f32 %v152, %v144
      %v158 = vmul.f32 %v152, %v145
      %v159 = vmul.f32 %v152, %v146
      %v160 = vmul.f32 %v152, %v147
      %v161 = vmul.f32 %v152, %v148
      %v162 = vmul.f32 %v152, %v149
      %v163 = vmul.f32 %v152, %v150
      %v164 = vmul.f32 %v152, %v151
      %v165 = vadd.f32 %v126, %v153
      %v166 = vadd.f32 %v127, %v154
      %v167 = vadd.f32 %v128, %v155
      %v168 = vadd.f32 %v129, %v156
      %v169 = vadd.f32 %v130, %v157
      %v170 = vadd.f32 %v131, %v158
      %v171 = vadd.f32 %v132, %v159
      %v172 = vadd.f32 %v133, %v160
      %v173 = vadd.f32 %v134, %v161
      %v174 = vadd.f32 %v135, %v162
      %v175 = vadd.f32 %v136, %v163
      %v176 = vadd.f32 %v137, %v164
      %vm177 = vcmask 146432
      %178 = vst.msk [vmem:[%s52] sm:$0xff] %vm177, %v165
      %179 = vst.msk [vmem:[%s52 + $0x8] sm:$0xff] %vm177, %v166
      %vm180 = vcmask 140288
      %181 = vst.msk [vmem:[%s52 + $0x10] sm:$0x3] %vm180, %v167
      %182 = vst.msk [vmem:[%s52 + $0x60] sm:$0xff] %vm177, %v168
      %183 = vst.msk [vmem:[%s52 + $0x68] sm:$0xff] %vm177, %v169
      %184 = vst.msk [vmem:[%s52 + $0x70] sm:$0x3] %vm180, %v170
      %185 = vst.msk [vmem:[%s52 + $0xc0] sm:$0xff] %vm177, %v171
      %186 = vst.msk [vmem:[%s52 + $0xc8] sm:$0xff] %vm177, %v172
      %187 = vst.msk [vmem:[%s52 + $0xd0] sm:$0x3] %vm180, %v173
      %188 = vst.msk [vmem:[%s52 + $0x120] sm:$0xff] %vm177, %v174
      %189 = vst.msk [vmem:[%s52 + $0x128] sm:$0xff] %vm177, %v175
      %190 = vst.msk [vmem:[%s52 + $0x130] sm:$0x3] %vm180, %v176
      %s191 = sld [smem:[#allocation5 + $0x1]]
      %s192 = sld [smem:[#allocation3 + $0x80]]
      %v193 = vld [vmem:[%s0] sm:$0xff]
      %v194 = vld [vmem:[%s0 + $0x8] sm:$0xff]
      %v195 = vld [vmem:[%s0 + $0x10] sm:$0x3]
      %v196 = vld [vmem:[%s0 + $0x48] sm:$0xff]
      %v197 = vld [vmem:[%s0 + $0x50] sm:$0xff]
      %v198 = vld [vmem:[%s0 + $0x58] sm:$0x3]
      %v199 = vld [vmem:[%s0 + $0x90] sm:$0xff]
      %v200 = vld [vmem:[%s0 + $0x98] sm:$0xff]
      %v201 = vld [vmem:[%s0 + $0xa0] sm:$0x3]
      %v202 = vld [vmem:[%s0 + $0xd8] sm:$0xff]
      %v203 = vld [vmem:[%s0 + $0xe0] sm:$0xff]
      %v204 = vld [vmem:[%s0 + $0xe8] sm:$0x3]
      %v205 = vstv %s192
      %v206 = vmul.f32 %v205, %v193
      %v207 = vmul.f32 %v205, %v194
      %v208 = vmul.f32 %v205, %v195
      %v209 = vmul.f32 %v205, %v196
      %v210 = vmul.f32 %v205, %v197
      %v211 = vmul.f32 %v205, %v198
      %v212 = vmul.f32 %v205, %v199
      %v213 = vmul.f32 %v205, %v200
      %v214 = vmul.f32 %v205, %v201
      %v215 = vmul.f32 %v205, %v202
      %v216 = vmul.f32 %v205, %v203
      %v217 = vmul.f32 %v205, %v204
      %v218 = vstv %s191
      %v219 = vadd.f32 %v218, %v206
      %v220 = vadd.f32 %v218, %v207
      %v221 = vadd.f32 %v218, %v208
      %v222 = vadd.f32 %v218, %v209
      %v223 = vadd.f32 %v218, %v210
      %v224 = vadd.f32 %v218, %v211
      %v225 = vadd.f32 %v218, %v212
      %v226 = vadd.f32 %v218, %v213
      %v227 = vadd.f32 %v218, %v214
      %v228 = vadd.f32 %v218, %v215
      %v229 = vadd.f32 %v218, %v216
      %v230 = vadd.f32 %v218, %v217
      %s231 = sld [smem:[#allocation3 + $0x81]]
      %v232 = vld [vmem:[%s100] sm:$0xff]
      %v233 = vld [vmem:[%s100 + $0x8] sm:$0xff]
      %v234 = vld [vmem:[%s100 + $0x10] sm:$0x3]
      %v235 = vld [vmem:[%s100 + $0x48] sm:$0xff]
      %v236 = vld [vmem:[%s100 + $0x50] sm:$0xff]
      %v237 = vld [vmem:[%s100 + $0x58] sm:$0x3]
      %v238 = vld [vmem:[%s100 + $0x90] sm:$0xff]
      %v239 = vld [vmem:[%s100 + $0x98] sm:$0xff]
      %v240 = vld [vmem:[%s100 + $0xa0] sm:$0x3]
      %v241 = vld [vmem:[%s100 + $0xd8] sm:$0xff]
      %v242 = vld [vmem:[%s100 + $0xe0] sm:$0xff]
      %v243 = vld [vmem:[%s100 + $0xe8] sm:$0x3]
      %v244 = vstv %s231
      %v245 = vmul.f32 %v244, %v232
      %v246 = vmul.f32 %v244, %v233
      %v247 = vmul.f32 %v244, %v234
      %v248 = vmul.f32 %v244, %v235
      %v249 = vmul.f32 %v244, %v236
      %v250 = vmul.f32 %v244, %v237
      %v251 = vmul.f32 %v244, %v238
      %v252 = vmul.f32 %v244, %v239
      %v253 = vmul.f32 %v244, %v240
      %v254 = vmul.f32 %v244, %v241
      %v255 = vmul.f32 %v244, %v242
      %v256 = vmul.f32 %v244, %v243
      %v257 = vadd.f32 %v219, %v245
      %v258 = vadd.f32 %v220, %v246
      %v259 = vadd.f32 %v221, %v247
      %v260 = vadd.f32 %v222, %v248
      %v261 = vadd.f32 %v223, %v249
      %v262 = vadd.f32 %v224, %v250
      %v263 = vadd.f32 %v225, %v251
      %v264 = vadd.f32 %v226, %v252
      %v265 = vadd.f32 %v227, %v253
      %v266 = vadd.f32 %v228, %v254
      %v267 = vadd.f32 %v229, %v255
      %v268 = vadd.f32 %v230, %v256
      %s269 = sld [smem:[#allocation3 + $0x82]]
      %v270 = vld [vmem:[%s139] sm:$0xff]
      %v271 = vld [vmem:[%s139 + $0x8] sm:$0xff]
      %v272 = vld [vmem:[%s139 + $0x10] sm:$0x3]
      %v273 = vld [vmem:[%s139 + $0x48] sm:$0xff]
      %v274 = vld [vmem:[%s139 + $0x50] sm:$0xff]
      %v275 = vld [vmem:[%s139 + $0x58] sm:$0x3]
      %v276 = vld [vmem:[%s139 + $0x90] sm:$0xff]
      %v277 = vld [vmem:[%s139 + $0x98] sm:$0xff]
      %v278 = vld [vmem:[%s139 + $0xa0] sm:$0x3]
      %v279 = vld [vmem:[%s139 + $0xd8] sm:$0xff]
      %v280 = vld [vmem:[%s139 + $0xe0] sm:$0xff]
      %v281 = vld [vmem:[%s139 + $0xe8] sm:$0x3]
      %v282 = vstv %s269
      %v283 = vmul.f32 %v282, %v270
      %v284 = vmul.f32 %v282, %v271
      %v285 = vmul.f32 %v282, %v272
      %v286 = vmul.f32 %v282, %v273
      %v287 = vmul.f32 %v282, %v274
      %v288 = vmul.f32 %v282, %v275
      %v289 = vmul.f32 %v282, %v276
      %v290 = vmul.f32 %v282, %v277
      %v291 = vmul.f32 %v282, %v278
      %v292 = vmul.f32 %v282, %v279
      %v293 = vmul.f32 %v282, %v280
      %v294 = vmul.f32 %v282, %v281
      %v295 = vadd.f32 %v257, %v283
      %v296 = vadd.f32 %v258, %v284
      %v297 = vadd.f32 %v259, %v285
      %v298 = vadd.f32 %v260, %v286
      %v299 = vadd.f32 %v261, %v287
      %v300 = vadd.f32 %v262, %v288
      %v301 = vadd.f32 %v263, %v289
      %v302 = vadd.f32 %v264, %v290
      %v303 = vadd.f32 %v265, %v291
      %v304 = vadd.f32 %v266, %v292
      %v305 = vadd.f32 %v267, %v293
      %v306 = vadd.f32 %v268, %v294
      %s307 = scalar_lea.vmem %s52, 24
      %308 = vst.msk [vmem:[%s307] sm:$0xff] %vm177, %v295
      %309 = vst.msk [vmem:[%s307 + $0x8] sm:$0xff] %vm177, %v296
      %310 = vst.msk [vmem:[%s307 + $0x10] sm:$0x3] %vm180, %v297
      %311 = vst.msk [vmem:[%s307 + $0x60] sm:$0xff] %vm177, %v298
      %312 = vst.msk [vmem:[%s307 + $0x68] sm:$0xff] %vm177, %v299
      %313 = vst.msk [vmem:[%s307 + $0x70] sm:$0x3] %vm180, %v300
      %314 = vst.msk [vmem:[%s307 + $0xc0] sm:$0xff] %vm177, %v301
      %315 = vst.msk [vmem:[%s307 + $0xc8] sm:$0xff] %vm177, %v302
      %316 = vst.msk [vmem:[%s307 + $0xd0] sm:$0x3] %vm180, %v303
      %317 = vst.msk [vmem:[%s307 + $0x120] sm:$0xff] %vm177, %v304
      %318 = vst.msk [vmem:[%s307 + $0x128] sm:$0xff] %vm177, %v305
      %319 = vst.msk [vmem:[%s307 + $0x130] sm:$0x3] %vm180, %v306
      %s320 = sld [smem:[#allocation5 + $0x2]]
      %s321 = sld [smem:[#allocation3 + $0x100]]
      %v322 = vld [vmem:[%s0] sm:$0xff]
      %v323 = vld [vmem:[%s0 + $0x8] sm:$0xff]
      %v324 = vld [vmem:[%s0 + $0x10] sm:$0x3]
      %v325 = vld [vmem:[%s0 + $0x48] sm:$0xff]
      %v326 = vld [vmem:[%s0 + $0x50] sm:$0xff]
      %v327 = vld [vmem:[%s0 + $0x58] sm:$0x3]
      %v328 = vld [vmem:[%s0 + $0x90] sm:$0xff]
      %v329 = vld [vmem:[%s0 + $0x98] sm:$0xff]
      %v330 = vld [vmem:[%s0 + $0xa0] sm:$0x3]
      %v331 = vld [vmem:[%s0 + $0xd8] sm:$0xff]
      %v332 = vld [vmem:[%s0 + $0xe0] sm:$0xff]
      %v333 = vld [vmem:[%s0 + $0xe8] sm:$0x3]
      %v334 = vstv %s321
      %v335 = vmul.f32 %v334, %v322
      %v336 = vmul.f32 %v334, %v323
      %v337 = vmul.f32 %v334, %v324
      %v338 = vmul.f32 %v334, %v325
      %v339 = vmul.f32 %v334, %v326
      %v340 = vmul.f32 %v334, %v327
      %v341 = vmul.f32 %v334, %v328
      %v342 = vmul.f32 %v334, %v329
      %v343 = vmul.f32 %v334, %v330
      %v344 = vmul.f32 %v334, %v331
      %v345 = vmul.f32 %v334, %v332
      %v346 = vmul.f32 %v334, %v333
      %v347 = vstv %s320
      %v348 = vadd.f32 %v347, %v335
      %v349 = vadd.f32 %v347, %v336
      %v350 = vadd.f32 %v347, %v337
      %v351 = vadd.f32 %v347, %v338
      %v352 = vadd.f32 %v347, %v339
      %v353 = vadd.f32 %v347, %v340
      %v354 = vadd.f32 %v347, %v341
      %v355 = vadd.f32 %v347, %v342
      %v356 = vadd.f32 %v347, %v343
      %v357 = vadd.f32 %v347, %v344
      %v358 = vadd.f32 %v347, %v345
      %v359 = vadd.f32 %v347, %v346
      %s360 = sld [smem:[#allocation3 + $0x101]]
      %v361 = vld [vmem:[%s100] sm:$0xff]
      %v362 = vld [vmem:[%s100 + $0x8] sm:$0xff]
      %v363 = vld [vmem:[%s100 + $0x10] sm:$0x3]
      %v364 = vld [vmem:[%s100 + $0x48] sm:$0xff]
      %v365 = vld [vmem:[%s100 + $0x50] sm:$0xff]
      %v366 = vld [vmem:[%s100 + $0x58] sm:$0x3]
      %v367 = vld [vmem:[%s100 + $0x90] sm:$0xff]
      %v368 = vld [vmem:[%s100 + $0x98] sm:$0xff]
      %v369 = vld [vmem:[%s100 + $0xa0] sm:$0x3]
      %v370 = vld [vmem:[%s100 + $0xd8] sm:$0xff]
      %v371 = vld [vmem:[%s100 + $0xe0] sm:$0xff]
      %v372 = vld [vmem:[%s100 + $0xe8] sm:$0x3]
      %v373 = vstv %s360
      %v374 = vmul.f32 %v373, %v361
      %v375 = vmul.f32 %v373, %v362
      %v376 = vmul.f32 %v373, %v363
      %v377 = vmul.f32 %v373, %v364
      %v378 = vmul.f32 %v373, %v365
      %v379 = vmul.f32 %v373, %v366
      %v380 = vmul.f32 %v373, %v367
      %v381 = vmul.f32 %v373, %v368
      %v382 = vmul.f32 %v373, %v369
      %v383 = vmul.f32 %v373, %v370
      %v384 = vmul.f32 %v373, %v371
      %v385 = vmul.f32 %v373, %v372
      %v386 = vadd.f32 %v348, %v374
      %v387 = vadd.f32 %v349, %v375
      %v388 = vadd.f32 %v350, %v376
      %v389 = vadd.f32 %v351, %v377
      %v390 = vadd.f32 %v352, %v378
      %v391 = vadd.f32 %v353, %v379
      %v392 = vadd.f32 %v354, %v380
      %v393 = vadd.f32 %v355, %v381
      %v394 = vadd.f32 %v356, %v382
      %v395 = vadd.f32 %v357, %v383
      %v396 = vadd.f32 %v358, %v384
      %v397 = vadd.f32 %v359, %v385
      %s398 = sld [smem:[#allocation3 + $0x102]]
      %v399 = vld [vmem:[%s139] sm:$0xff]
      %v400 = vld [vmem:[%s139 + $0x8] sm:$0xff]
      %v401 = vld [vmem:[%s139 + $0x10] sm:$0x3]
      %v402 = vld [vmem:[%s139 + $0x48] sm:$0xff]
      %v403 = vld [vmem:[%s139 + $0x50] sm:$0xff]
      %v404 = vld [vmem:[%s139 + $0x58] sm:$0x3]
      %v405 = vld [vmem:[%s139 + $0x90] sm:$0xff]
      %v406 = vld [vmem:[%s139 + $0x98] sm:$0xff]
      %v407 = vld [vmem:[%s139 + $0xa0] sm:$0x3]
      %v408 = vld [vmem:[%s139 + $0xd8] sm:$0xff]
      %v409 = vld [vmem:[%s139 + $0xe0] sm:$0xff]
      %v410 = vld [vmem:[%s139 + $0xe8] sm:$0x3]
      %v411 = vstv %s398
      %v412 = vmul.f32 %v411, %v399
      %v413 = vmul.f32 %v411, %v400
      %v414 = vmul.f32 %v411, %v401
      %v415 = vmul.f32 %v411, %v402
      %v416 = vmul.f32 %v411, %v403
      %v417 = vmul.f32 %v411, %v404
      %v418 = vmul.f32 %v411, %v405
      %v419 = vmul.f32 %v411, %v406
      %v420 = vmul.f32 %v411, %v407
      %v421 = vmul.f32 %v411, %v408
      %v422 = vmul.f32 %v411, %v409
      %v423 = vmul.f32 %v411, %v410
      %v424 = vadd.f32 %v386, %v412
      %v425 = vadd.f32 %v387, %v413
      %v426 = vadd.f32 %v388, %v414
      %v427 = vadd.f32 %v389, %v415
      %v428 = vadd.f32 %v390, %v416
      %v429 = vadd.f32 %v391, %v417
      %v430 = vadd.f32 %v392, %v418
      %v431 = vadd.f32 %v393, %v419
      %v432 = vadd.f32 %v394, %v420
      %v433 = vadd.f32 %v395, %v421
      %v434 = vadd.f32 %v396, %v422
      %v435 = vadd.f32 %v397, %v423
      %s436 = scalar_lea.vmem %s52, 48
      %437 = vst.msk [vmem:[%s436] sm:$0xff] %vm177, %v424
      %438 = vst.msk [vmem:[%s436 + $0x8] sm:$0xff] %vm177, %v425
      %439 = vst.msk [vmem:[%s436 + $0x10] sm:$0x3] %vm180, %v426
      %440 = vst.msk [vmem:[%s436 + $0x60] sm:$0xff] %vm177, %v427
      %441 = vst.msk [vmem:[%s436 + $0x68] sm:$0xff] %vm177, %v428
      %442 = vst.msk [vmem:[%s436 + $0x70] sm:$0x3] %vm180, %v429
      %443 = vst.msk [vmem:[%s436 + $0xc0] sm:$0xff] %vm177, %v430
      %444 = vst.msk [vmem:[%s436 + $0xc8] sm:$0xff] %vm177, %v431
      %445 = vst.msk [vmem:[%s436 + $0xd0] sm:$0x3] %vm180, %v432
      %446 = vst.msk [vmem:[%s436 + $0x120] sm:$0xff] %vm177, %v433
      %447 = vst.msk [vmem:[%s436 + $0x128] sm:$0xff] %vm177, %v434
      %448 = vst.msk [vmem:[%s436 + $0x130] sm:$0x3] %vm180, %v435
      %s449 = sld [smem:[#allocation5 + $0x3]]
      %s450 = sld [smem:[#allocation3 + $0x180]]
      %v451 = vld [vmem:[%s0] sm:$0xff]
      %v452 = vld [vmem:[%s0 + $0x8] sm:$0xff]
      %v453 = vld [vmem:[%s0 + $0x10] sm:$0x3]
      %v454 = vld [vmem:[%s0 + $0x48] sm:$0xff]
      %v455 = vld [vmem:[%s0 + $0x50] sm:$0xff]
      %v456 = vld [vmem:[%s0 + $0x58] sm:$0x3]
      %v457 = vld [vmem:[%s0 + $0x90] sm:$0xff]
      %v458 = vld [vmem:[%s0 + $0x98] sm:$0xff]
      %v459 = vld [vmem:[%s0 + $0xa0] sm:$0x3]
      %v460 = vld [vmem:[%s0 + $0xd8] sm:$0xff]
      %v461 = vld [vmem:[%s0 + $0xe0] sm:$0xff]
      %v462 = vld [vmem:[%s0 + $0xe8] sm:$0x3]
      %v463 = vstv %s450
      %v464 = vmul.f32 %v463, %v451
      %v465 = vmul.f32 %v463, %v452
      %v466 = vmul.f32 %v463, %v453
      %v467 = vmul.f32 %v463, %v454
      %v468 = vmul.f32 %v463, %v455
      %v469 = vmul.f32 %v463, %v456
      %v470 = vmul.f32 %v463, %v457
      %v471 = vmul.f32 %v463, %v458
      %v472 = vmul.f32 %v463, %v459
      %v473 = vmul.f32 %v463, %v460
      %v474 = vmul.f32 %v463, %v461
      %v475 = vmul.f32 %v463, %v462
      %v476 = vstv %s449
      %v477 = vadd.f32 %v476, %v464
      %v478 = vadd.f32 %v476, %v465
      %v479 = vadd.f32 %v476, %v466
      %v480 = vadd.f32 %v476, %v467
      %v481 = vadd.f32 %v476, %v468
      %v482 = vadd.f32 %v476, %v469
      %v483 = vadd.f32 %v476, %v470
      %v484 = vadd.f32 %v476, %v471
      %v485 = vadd.f32 %v476, %v472
      %v486 = vadd.f32 %v476, %v473
      %v487 = vadd.f32 %v476, %v474
      %v488 = vadd.f32 %v476, %v475
      %s489 = sld [smem:[#allocation3 + $0x181]]
      %v490 = vld [vmem:[%s100] sm:$0xff]
      %v491 = vld [vmem:[%s100 + $0x8] sm:$0xff]
      %v492 = vld [vmem:[%s100 + $0x10] sm:$0x3]
      %v493 = vld [vmem:[%s100 + $0x48] sm:$0xff]
      %v494 = vld [vmem:[%s100 + $0x50] sm:$0xff]
      %v495 = vld [vmem:[%s100 + $0x58] sm:$0x3]
      %v496 = vld [vmem:[%s100 + $0x90] sm:$0xff]
      %v497 = vld [vmem:[%s100 + $0x98] sm:$0xff]
      %v498 = vld [vmem:[%s100 + $0xa0] sm:$0x3]
      %v499 = vld [vmem:[%s100 + $0xd8] sm:$0xff]
      %v500 = vld [vmem:[%s100 + $0xe0] sm:$0xff]
      %v501 = vld [vmem:[%s100 + $0xe8] sm:$0x3]
      %v502 = vstv %s489
      %v503 = vmul.f32 %v502, %v490
      %v504 = vmul.f32 %v502, %v491
      %v505 = vmul.f32 %v502, %v492
      %v506 = vmul.f32 %v502, %v493
      %v507 = vmul.f32 %v502, %v494
      %v508 = vmul.f32 %v502, %v495
      %v509 = vmul.f32 %v502, %v496
      %v510 = vmul.f32 %v502, %v497
      %v511 = vmul.f32 %v502, %v498
      %v512 = vmul.f32 %v502, %v499
      %v513 = vmul.f32 %v502, %v500
      %v514 = vmul.f32 %v502, %v501
      %v515 = vadd.f32 %v477, %v503
      %v516 = vadd.f32 %v478, %v504
      %v517 = vadd.f32 %v479, %v505
      %v518 = vadd.f32 %v480, %v506
      %v519 = vadd.f32 %v481, %v507
      %v520 = vadd.f32 %v482, %v508
      %v521 = vadd.f32 %v483, %v509
      %v522 = vadd.f32 %v484, %v510
      %v523 = vadd.f32 %v485, %v511
      %v524 = vadd.f32 %v486, %v512
      %v525 = vadd.f32 %v487, %v513
      %v526 = vadd.f32 %v488, %v514
      %s527 = sld [smem:[#allocation3 + $0x182]]
      %v528 = vld [vmem:[%s139] sm:$0xff]
      %v529 = vld [vmem:[%s139 + $0x8] sm:$0xff]
      %v530 = vld [vmem:[%s139 + $0x10] sm:$0x3]
      %v531 = vld [vmem:[%s139 + $0x48] sm:$0xff]
      %v532 = vld [vmem:[%s139 + $0x50] sm:$0xff]
      %v533 = vld [vmem:[%s139 + $0x58] sm:$0x3]
      %v534 = vld [vmem:[%s139 + $0x90] sm:$0xff]
      %v535 = vld [vmem:[%s139 + $0x98] sm:$0xff]
      %v536 = vld [vmem:[%s139 + $0xa0] sm:$0x3]
      %v537 = vld [vmem:[%s139 + $0xd8] sm:$0xff]
      %v538 = vld [vmem:[%s139 + $0xe0] sm:$0xff]
      %v539 = vld [vmem:[%s139 + $0xe8] sm:$0x3]
      %v540 = vstv %s527
      %v541 = vmul.f32 %v540, %v528
      %v542 = vmul.f32 %v540, %v529
      %v543 = vmul.f32 %v540, %v530
      %v544 = vmul.f32 %v540, %v531
      %v545 = vmul.f32 %v540, %v532
      %v546 = vmul.f32 %v540, %v533
      %v547 = vmul.f32 %v540, %v534
      %v548 = vmul.f32 %v540, %v535
      %v549 = vmul.f32 %v540, %v536
      %v550 = vmul.f32 %v540, %v537
      %v551 = vmul.f32 %v540, %v538
      %v552 = vmul.f32 %v540, %v539
      %v553 = vadd.f32 %v515, %v541
      %v554 = vadd.f32 %v516, %v542
      %v555 = vadd.f32 %v517, %v543
      %v556 = vadd.f32 %v518, %v544
      %v557 = vadd.f32 %v519, %v545
      %v558 = vadd.f32 %v520, %v546
      %v559 = vadd.f32 %v521, %v547
      %v560 = vadd.f32 %v522, %v548
      %v561 = vadd.f32 %v523, %v549
      %v562 = vadd.f32 %v524, %v550
      %v563 = vadd.f32 %v525, %v551
      %v564 = vadd.f32 %v526, %v552
      %s565 = scalar_lea.vmem %s52, 72
      %566 = vst.msk [vmem:[%s565] sm:$0xff] %vm177, %v553
      %567 = vst.msk [vmem:[%s565 + $0x8] sm:$0xff] %vm177, %v554
      %568 = vst.msk [vmem:[%s565 + $0x10] sm:$0x3] %vm180, %v555
      %569 = vst.msk [vmem:[%s565 + $0x60] sm:$0xff] %vm177, %v556
      %570 = vst.msk [vmem:[%s565 + $0x68] sm:$0xff] %vm177, %v557
      %571 = vst.msk [vmem:[%s565 + $0x70] sm:$0x3] %vm180, %v558
      %572 = vst.msk [vmem:[%s565 + $0xc0] sm:$0xff] %vm177, %v559
      %573 = vst.msk [vmem:[%s565 + $0xc8] sm:$0xff] %vm177, %v560
      %574 = vst.msk [vmem:[%s565 + $0xd0] sm:$0x3] %vm180, %v561
      %575 = vst.msk [vmem:[%s565 + $0x120] sm:$0xff] %vm177, %v562
      %576 = vst.msk [vmem:[%s565 + $0x128] sm:$0xff] %vm177, %v563
      %577 = vst.msk [vmem:[%s565 + $0x130] sm:$0x3] %vm180, %v564
    $region25: #{tpu_custom_call.1} parent=1 // pred_fallthru
      _
    %s578 = sadd.s32 0, 0
    %s579 = smul.u32 4, %s578
    %p580 = scmp.lt.s32.totalorder %s579, 3
    %s581 = scalar_select %p580, %s579, 3
    %s582 = smul.addr %s581, 12
    %s583 = smul.addr %s582, 8
    %s584 = scalar_lea.vmem %s3, %s583
    // Predicated region
    $region26: #{tpu_custom_call.1} parent=1 // pred_check
      _
    $region27: #{tpu_custom_call.1} parent=1 // pred_check_branch
      %586 = sbr.rel (0) target = $region29
    $region28: #{tpu_custom_call.1} parent=1 // pred_region
      %s587 = sadd.s32 0, 0
      %s588 = smul.u32 4, %s587
    $region29: #{tpu_custom_call.1} parent=1 // pred_fallthru
      _
    // Predicated region
    $region30: #{tpu_custom_call.1} parent=1 // pred_check
      _
    $region31: #{tpu_custom_call.1} parent=1 // pred_check_branch
      %590 = sbr.rel (0) target = $region33
    $region32: #{tpu_custom_call.1} parent=1 // pred_region
      %s591 = sadd.s32 0, 0
      %s592 = smul.u32 4, %s591
      %p593 = scmp.lt.s32.totalorder %s592, 3
      %s594 = scalar_select %p593, %s592, 3
      %s595 = smul.addr %s594, 12
      %s596 = smul.addr %s595, 8
      %s597 = scalar_lea.vmem %s3, %s596
    $region33: #{tpu_custom_call.1} parent=1 // pred_fallthru
      _
    %598 = vsyncpa [#allocation4], 1
    %599 = vsyncpa [#allocation6], 1

</llo_original>
